<compile_context>
chip_gen: v5e
topology: v5e:2x2
jax: 0.10.0
libtpu: 0.0.40
codegen_flags: <defaults>
</compile_context>

<pallas_src>
import functools
import math

import jax
import jax.numpy as jnp
from jax.experimental import pallas as pl
from jax.experimental.pallas import tpu as pltpu

_LANE = 128     # vreg lane width
_SUBLANE = 8    # vreg sublane count (f32)


def _round_up(x, m):
    return (x + m - 1) // m * m


def _bayesian_nn_kernel(x_ref, wmu_ref, wsig_ref, weps_ref,
                        bmu_ref, bsig_ref, beps_ref, o_ref,
                        *, n_layers, r_pad):
    """Fused forward: 5x (w = mu + sigma*eps -> x@w + b -> relu) + final layer.

    Shapes (all f32, VMEM-resident):
      x_ref   : [B_pad, D_pad]
      wmu/wsig/weps : [L, r_pad, D_pad]   (row-compact [in, out] layout)
      bmu/bsig/beps : [L, 1, D_pad]
      o_ref   : [B_pad, D_pad]
    """
    h = x_ref[...]                                   # [B_pad, D_pad]
    for layer in range(n_layers):                    # static unroll (6 layers)
        # Reparameterization trick over the real (row-compact) block only.
        # Padded rows/lanes have mu = 0 and sigma = 0 exactly, and padded
        # lanes of h are exactly 0, so h @ w_full == h[:, :r_pad] @ w_compact.
        w = wmu_ref[layer] + wsig_ref[layer] * weps_ref[layer]   # [r_pad, D_pad]
        b = bmu_ref[layer] + bsig_ref[layer] * beps_ref[layer]   # [1, D_pad]
        y = jnp.dot(h[:, :r_pad], w, preferred_element_type=jnp.float32) + b
        if layer < n_layers - 1:
            y = jnp.maximum(y, 0.0)                  # relu on hidden layers
        h = y
    o_ref[...] = h.astype(o_ref.dtype)


def init_bayesian_nn_params(key, input_dim, hidden_dim):
    """Row-compact, [in,out]-layout parameters for the 6 BayesianLinear layers.

    Real regions mirror the PyTorch init (mu ~ U(-0.2, 0.2),
    sigma = exp(-5.0)).  Padded regions store mu = 0 and sigma = EXACTLY 0.0
    so they contribute nothing to the padded network.
    """
    dims = ([(input_dim, hidden_dim)] + [(hidden_dim, hidden_dim)] * 4
            + [(hidden_dim, 1)])
    n_layers = len(dims)
    d_pad = _round_up(max(input_dim, hidden_dim, 1), _LANE)
    r_pad = _round_up(max(input_dim, hidden_dim, 1), _SUBLANE)
    sig0 = math.exp(-5.0)   # exp(log_sigma) precomputed once (not per forward)

    wmu = jnp.zeros((n_layers, r_pad, d_pad), jnp.float32)
    wsig = jnp.zeros((n_layers, r_pad, d_pad), jnp.float32)
    bmu = jnp.zeros((n_layers, 1, d_pad), jnp.float32)
    bsig = jnp.zeros((n_layers, 1, d_pad), jnp.float32)

    for layer, (fan_in, fan_out) in enumerate(dims):
        key, k_w, k_b = jax.random.split(key, 3)
        wmu = wmu.at[layer, :fan_in, :fan_out].set(
            jax.random.uniform(k_w, (fan_in, fan_out), jnp.float32,
                               minval=-0.2, maxval=0.2))
        wsig = wsig.at[layer, :fan_in, :fan_out].set(sig0)
        bmu = bmu.at[layer, 0, :fan_out].set(
            jax.random.uniform(k_b, (fan_out,), jnp.float32,
                               minval=-0.2, maxval=0.2))
        bsig = bsig.at[layer, 0, :fan_out].set(sig0)

    params = dict(weight_mu=wmu, weight_sigma=wsig,
                  bias_mu=bmu, bias_sigma=bsig)
    out_features = dims[-1][1]
    return params, out_features


def bayesian_nn_forward(params, x, out_features, key):
    """BayesianNN forward.  x: [batch, input_dim] f32 -> [batch, out_features].

    `key` drives the reparameterization noise (fresh eps per call, matching
    torch.randn_like in the PyTorch module's forward).
    """
    wmu = params["weight_mu"]            # [L, r_pad, D_pad]
    wsig = params["weight_sigma"]
    bmu = params["bias_mu"]              # [L, 1, D_pad]
    bsig = params["bias_sigma"]
    n_layers, r_pad, d_pad = wmu.shape

    batch, in_dim = x.shape
    b_pad = _round_up(max(batch, 1), _SUBLANE)
    x_pad = jnp.zeros((b_pad, d_pad), jnp.float32).at[:batch, :in_dim].set(x)

    # Reparameterization noise drawn outside the kernel (portable; compact
    # shapes so only the real parameter rows get noise / HBM traffic).
    k_w, k_b = jax.random.split(key)
    w_eps = jax.random.normal(k_w, wmu.shape, jnp.float32)
    b_eps = jax.random.normal(k_b, bmu.shape, jnp.float32)

    vmem = pl.BlockSpec(memory_space=pltpu.MemorySpace.VMEM)
    kernel = functools.partial(_bayesian_nn_kernel,
                               n_layers=n_layers, r_pad=r_pad)
    y_pad = pl.pallas_call(
        kernel,
        out_shape=jax.ShapeDtypeStruct((b_pad, d_pad), jnp.float32),
        in_specs=[vmem] * 7,
        out_specs=vmem,
    )(x_pad, wmu, wsig, w_eps, bmu, bsig, b_eps)

    # Lane-dense kernel output; slice the real logits outside the kernel.
    return y_pad[:batch, :out_features]


if __name__ == "__main__":
    # Small, deterministic example shapes.
    batch = 8
    input_dim = 16
    hidden_dim = 32

    root = jax.random.PRNGKey(0)
    k_params, k_x, k_noise = jax.random.split(root, 3)

    params, out_features = init_bayesian_nn_params(k_params, input_dim, hidden_dim)
    x = jax.random.normal(k_x, (batch, input_dim), jnp.float32)

    y = bayesian_nn_forward(params, x, out_features, key=k_noise)
    y = jax.block_until_ready(y)

    assert y.shape == (batch, 1), y.shape
    assert bool(jnp.all(jnp.isfinite(y))), "non-finite output"
    print("KERNEL_OK")
</pallas_src>

<mosaic_0001>
module attributes {stable_mosaic.version = 11 : i64} {
  func.func @_bayesian_nn_kernel(%arg0: memref<8x128xf32, #tpu.memory_space<vmem>>, %arg1: memref<6x32x128xf32, #tpu.memory_space<vmem>>, %arg2: memref<6x32x128xf32, #tpu.memory_space<vmem>>, %arg3: memref<6x32x128xf32, #tpu.memory_space<vmem>>, %arg4: memref<6x1x128xf32, #tpu.memory_space<vmem>>, %arg5: memref<6x1x128xf32, #tpu.memory_space<vmem>>, %arg6: memref<6x1x128xf32, #tpu.memory_space<vmem>>, %arg7: memref<8x128xf32, #tpu.memory_space<vmem>>) attributes {dimension_semantics = [], scalar_prefetch = 0 : i64, scratch_operands = 0 : i64, tpu.core_type = #tpu.core_type<tc>} {
    %c0 = arith.constant 0 : index
    %c0_0 = arith.constant 0 : index
    %0 = vector.load %arg0[%c0, %c0_0] : memref<8x128xf32, #tpu.memory_space<vmem>>, vector<8x128xf32>
    %c0_1 = arith.constant 0 : index
    %c0_2 = arith.constant 0 : index
    %c0_3 = arith.constant 0 : index
    %1 = vector.load %arg1[%c0_1, %c0_2, %c0_3] : memref<6x32x128xf32, #tpu.memory_space<vmem>>, vector<1x32x128xf32>
    %2 = vector.shape_cast %1 : vector<1x32x128xf32> to vector<32x128xf32>
    %c0_4 = arith.constant 0 : index
    %c0_5 = arith.constant 0 : index
    %c0_6 = arith.constant 0 : index
    %3 = vector.load %arg2[%c0_4, %c0_5, %c0_6] : memref<6x32x128xf32, #tpu.memory_space<vmem>>, vector<1x32x128xf32>
    %4 = vector.shape_cast %3 : vector<1x32x128xf32> to vector<32x128xf32>
    %c0_7 = arith.constant 0 : index
    %c0_8 = arith.constant 0 : index
    %c0_9 = arith.constant 0 : index
    %5 = vector.load %arg3[%c0_7, %c0_8, %c0_9] : memref<6x32x128xf32, #tpu.memory_space<vmem>>, vector<1x32x128xf32>
    %6 = vector.shape_cast %5 : vector<1x32x128xf32> to vector<32x128xf32>
    %7 = arith.mulf %4, %6 : vector<32x128xf32>
    %8 = arith.addf %2, %7 : vector<32x128xf32>
    %c0_10 = arith.constant 0 : index
    %c0_11 = arith.constant 0 : index
    %c0_12 = arith.constant 0 : index
    %9 = vector.load %arg4[%c0_10, %c0_11, %c0_12] : memref<6x1x128xf32, #tpu.memory_space<vmem>>, vector<1x1x128xf32>
    %10 = vector.shape_cast %9 : vector<1x1x128xf32> to vector<1x128xf32>
    %c0_13 = arith.constant 0 : index
    %c0_14 = arith.constant 0 : index
    %c0_15 = arith.constant 0 : index
    %11 = vector.load %arg5[%c0_13, %c0_14, %c0_15] : memref<6x1x128xf32, #tpu.memory_space<vmem>>, vector<1x1x128xf32>
    %12 = vector.shape_cast %11 : vector<1x1x128xf32> to vector<1x128xf32>
    %c0_16 = arith.constant 0 : index
    %c0_17 = arith.constant 0 : index
    %c0_18 = arith.constant 0 : index
    %13 = vector.load %arg6[%c0_16, %c0_17, %c0_18] : memref<6x1x128xf32, #tpu.memory_space<vmem>>, vector<1x1x128xf32>
    %14 = vector.shape_cast %13 : vector<1x1x128xf32> to vector<1x128xf32>
    %15 = arith.mulf %12, %14 : vector<1x128xf32>
    %16 = arith.addf %10, %15 : vector<1x128xf32>
    %17 = vector.extract_strided_slice %0 {offsets = [0, 0], sizes = [8, 32], strides = [1, 1]} : vector<8x128xf32> to vector<8x32xf32>
    %cst = arith.constant dense<0.000000e+00> : vector<8x128xf32>
    %18 = tpu.matmul %17, %8, %cst {dimension_numbers = #tpu.dot_dimension_numbers<[1], [0], [0], [1], [0, 0, 1, 1], [], []>} : vector<8x32xf32>, vector<32x128xf32>, vector<8x128xf32> -> vector<8x128xf32>
    %19 = vector.broadcast %16 : vector<1x128xf32> to vector<8x128xf32>
    %20 = arith.addf %18, %19 : vector<8x128xf32>
    %cst_19 = arith.constant 0.000000e+00 : f32
    %21 = vector.broadcast %cst_19 : f32 to vector<8x128xf32>
    %22 = arith.maximumf %20, %21 : vector<8x128xf32>
    %c1 = arith.constant 1 : index
    %c0_20 = arith.constant 0 : index
    %c0_21 = arith.constant 0 : index
    %23 = vector.load %arg1[%c1, %c0_20, %c0_21] : memref<6x32x128xf32, #tpu.memory_space<vmem>>, vector<1x32x128xf32>
    %24 = vector.shape_cast %23 : vector<1x32x128xf32> to vector<32x128xf32>
    %c1_22 = arith.constant 1 : index
    %c0_23 = arith.constant 0 : index
    %c0_24 = arith.constant 0 : index
    %25 = vector.load %arg2[%c1_22, %c0_23, %c0_24] : memref<6x32x128xf32, #tpu.memory_space<vmem>>, vector<1x32x128xf32>
    %26 = vector.shape_cast %25 : vector<1x32x128xf32> to vector<32x128xf32>
    %c1_25 = arith.constant 1 : index
    %c0_26 = arith.constant 0 : index
    %c0_27 = arith.constant 0 : index
    %27 = vector.load %arg3[%c1_25, %c0_26, %c0_27] : memref<6x32x128xf32, #tpu.memory_space<vmem>>, vector<1x32x128xf32>
    %28 = vector.shape_cast %27 : vector<1x32x128xf32> to vector<32x128xf32>
    %29 = arith.mulf %26, %28 : vector<32x128xf32>
    %30 = arith.addf %24, %29 : vector<32x128xf32>
    %c1_28 = arith.constant 1 : index
    %c0_29 = arith.constant 0 : index
    %c0_30 = arith.constant 0 : index
    %31 = vector.load %arg4[%c1_28, %c0_29, %c0_30] : memref<6x1x128xf32, #tpu.memory_space<vmem>>, vector<1x1x128xf32>
    %32 = vector.shape_cast %31 : vector<1x1x128xf32> to vector<1x128xf32>
    %c1_31 = arith.constant 1 : index
    %c0_32 = arith.constant 0 : index
    %c0_33 = arith.constant 0 : index
    %33 = vector.load %arg5[%c1_31, %c0_32, %c0_33] : memref<6x1x128xf32, #tpu.memory_space<vmem>>, vector<1x1x128xf32>
    %34 = vector.shape_cast %33 : vector<1x1x128xf32> to vector<1x128xf32>
    %c1_34 = arith.constant 1 : index
    %c0_35 = arith.constant 0 : index
    %c0_36 = arith.constant 0 : index
    %35 = vector.load %arg6[%c1_34, %c0_35, %c0_36] : memref<6x1x128xf32, #tpu.memory_space<vmem>>, vector<1x1x128xf32>
    %36 = vector.shape_cast %35 : vector<1x1x128xf32> to vector<1x128xf32>
    %37 = arith.mulf %34, %36 : vector<1x128xf32>
    %38 = arith.addf %32, %37 : vector<1x128xf32>
    %39 = vector.extract_strided_slice %22 {offsets = [0, 0], sizes = [8, 32], strides = [1, 1]} : vector<8x128xf32> to vector<8x32xf32>
    %cst_37 = arith.constant dense<0.000000e+00> : vector<8x128xf32>
    %40 = tpu.matmul %39, %30, %cst_37 {dimension_numbers = #tpu.dot_dimension_numbers<[1], [0], [0], [1], [0, 0, 1, 1], [], []>} : vector<8x32xf32>, vector<32x128xf32>, vector<8x128xf32> -> vector<8x128xf32>
    %41 = vector.broadcast %38 : vector<1x128xf32> to vector<8x128xf32>
    %42 = arith.addf %40, %41 : vector<8x128xf32>
    %cst_38 = arith.constant 0.000000e+00 : f32
    %43 = vector.broadcast %cst_38 : f32 to vector<8x128xf32>
    %44 = arith.maximumf %42, %43 : vector<8x128xf32>
    %c2 = arith.constant 2 : index
    %c0_39 = arith.constant 0 : index
    %c0_40 = arith.constant 0 : index
    %45 = vector.load %arg1[%c2, %c0_39, %c0_40] : memref<6x32x128xf32, #tpu.memory_space<vmem>>, vector<1x32x128xf32>
    %46 = vector.shape_cast %45 : vector<1x32x128xf32> to vector<32x128xf32>
    %c2_41 = arith.constant 2 : index
    %c0_42 = arith.constant 0 : index
    %c0_43 = arith.constant 0 : index
    %47 = vector.load %arg2[%c2_41, %c0_42, %c0_43] : memref<6x32x128xf32, #tpu.memory_space<vmem>>, vector<1x32x128xf32>
    %48 = vector.shape_cast %47 : vector<1x32x128xf32> to vector<32x128xf32>
    %c2_44 = arith.constant 2 : index
    %c0_45 = arith.constant 0 : index
    %c0_46 = arith.constant 0 : index
    %49 = vector.load %arg3[%c2_44, %c0_45, %c0_46] : memref<6x32x128xf32, #tpu.memory_space<vmem>>, vector<1x32x128xf32>
    %50 = vector.shape_cast %49 : vector<1x32x128xf32> to vector<32x128xf32>
    %51 = arith.mulf %48, %50 : vector<32x128xf32>
    %52 = arith.addf %46, %51 : vector<32x128xf32>
    %c2_47 = arith.constant 2 : index
    %c0_48 = arith.constant 0 : index
    %c0_49 = arith.constant 0 : index
    %53 = vector.load %arg4[%c2_47, %c0_48, %c0_49] : memref<6x1x128xf32, #tpu.memory_space<vmem>>, vector<1x1x128xf32>
    %54 = vector.shape_cast %53 : vector<1x1x128xf32> to vector<1x128xf32>
    %c2_50 = arith.constant 2 : index
    %c0_51 = arith.constant 0 : index
    %c0_52 = arith.constant 0 : index
    %55 = vector.load %arg5[%c2_50, %c0_51, %c0_52] : memref<6x1x128xf32, #tpu.memory_space<vmem>>, vector<1x1x128xf32>
    %56 = vector.shape_cast %55 : vector<1x1x128xf32> to vector<1x128xf32>
    %c2_53 = arith.constant 2 : index
    %c0_54 = arith.constant 0 : index
    %c0_55 = arith.constant 0 : index
    %57 = vector.load %arg6[%c2_53, %c0_54, %c0_55] : memref<6x1x128xf32, #tpu.memory_space<vmem>>, vector<1x1x128xf32>
    %58 = vector.shape_cast %57 : vector<1x1x128xf32> to vector<1x128xf32>
    %59 = arith.mulf %56, %58 : vector<1x128xf32>
    %60 = arith.addf %54, %59 : vector<1x128xf32>
    %61 = vector.extract_strided_slice %44 {offsets = [0, 0], sizes = [8, 32], strides = [1, 1]} : vector<8x128xf32> to vector<8x32xf32>
    %cst_56 = arith.constant dense<0.000000e+00> : vector<8x128xf32>
    %62 = tpu.matmul %61, %52, %cst_56 {dimension_numbers = #tpu.dot_dimension_numbers<[1], [0], [0], [1], [0, 0, 1, 1], [], []>} : vector<8x32xf32>, vector<32x128xf32>, vector<8x128xf32> -> vector<8x128xf32>
    %63 = vector.broadcast %60 : vector<1x128xf32> to vector<8x128xf32>
    %64 = arith.addf %62, %63 : vector<8x128xf32>
    %cst_57 = arith.constant 0.000000e+00 : f32
    %65 = vector.broadcast %cst_57 : f32 to vector<8x128xf32>
    %66 = arith.maximumf %64, %65 : vector<8x128xf32>
    %c3 = arith.constant 3 : index
    %c0_58 = arith.constant 0 : index
    %c0_59 = arith.constant 0 : index
    %67 = vector.load %arg1[%c3, %c0_58, %c0_59] : memref<6x32x128xf32, #tpu.memory_space<vmem>>, vector<1x32x128xf32>
    %68 = vector.shape_cast %67 : vector<1x32x128xf32> to vector<32x128xf32>
    %c3_60 = arith.constant 3 : index
    %c0_61 = arith.constant 0 : index
    %c0_62 = arith.constant 0 : index
    %69 = vector.load %arg2[%c3_60, %c0_61, %c0_62] : memref<6x32x128xf32, #tpu.memory_space<vmem>>, vector<1x32x128xf32>
    %70 = vector.shape_cast %69 : vector<1x32x128xf32> to vector<32x128xf32>
    %c3_63 = arith.constant 3 : index
    %c0_64 = arith.constant 0 : index
    %c0_65 = arith.constant 0 : index
    %71 = vector.load %arg3[%c3_63, %c0_64, %c0_65] : memref<6x32x128xf32, #tpu.memory_space<vmem>>, vector<1x32x128xf32>
    %72 = vector.shape_cast %71 : vector<1x32x128xf32> to vector<32x128xf32>
    %73 = arith.mulf %70, %72 : vector<32x128xf32>
    %74 = arith.addf %68, %73 : vector<32x128xf32>
    %c3_66 = arith.constant 3 : index
    %c0_67 = arith.constant 0 : index
    %c0_68 = arith.constant 0 : index
    %75 = vector.load %arg4[%c3_66, %c0_67, %c0_68] : memref<6x1x128xf32, #tpu.memory_space<vmem>>, vector<1x1x128xf32>
    %76 = vector.shape_cast %75 : vector<1x1x128xf32> to vector<1x128xf32>
    %c3_69 = arith.constant 3 : index
    %c0_70 = arith.constant 0 : index
    %c0_71 = arith.constant 0 : index
    %77 = vector.load %arg5[%c3_69, %c0_70, %c0_71] : memref<6x1x128xf32, #tpu.memory_space<vmem>>, vector<1x1x128xf32>
    %78 = vector.shape_cast %77 : vector<1x1x128xf32> to vector<1x128xf32>
    %c3_72 = arith.constant 3 : index
    %c0_73 = arith.constant 0 : index
    %c0_74 = arith.constant 0 : index
    %79 = vector.load %arg6[%c3_72, %c0_73, %c0_74] : memref<6x1x128xf32, #tpu.memory_space<vmem>>, vector<1x1x128xf32>
    %80 = vector.shape_cast %79 : vector<1x1x128xf32> to vector<1x128xf32>
    %81 = arith.mulf %78, %80 : vector<1x128xf32>
    %82 = arith.addf %76, %81 : vector<1x128xf32>
    %83 = vector.extract_strided_slice %66 {offsets = [0, 0], sizes = [8, 32], strides = [1, 1]} : vector<8x128xf32> to vector<8x32xf32>
    %cst_75 = arith.constant dense<0.000000e+00> : vector<8x128xf32>
    %84 = tpu.matmul %83, %74, %cst_75 {dimension_numbers = #tpu.dot_dimension_numbers<[1], [0], [0], [1], [0, 0, 1, 1], [], []>} : vector<8x32xf32>, vector<32x128xf32>, vector<8x128xf32> -> vector<8x128xf32>
    %85 = vector.broadcast %82 : vector<1x128xf32> to vector<8x128xf32>
    %86 = arith.addf %84, %85 : vector<8x128xf32>
    %cst_76 = arith.constant 0.000000e+00 : f32
    %87 = vector.broadcast %cst_76 : f32 to vector<8x128xf32>
    %88 = arith.maximumf %86, %87 : vector<8x128xf32>
    %c4 = arith.constant 4 : index
    %c0_77 = arith.constant 0 : index
    %c0_78 = arith.constant 0 : index
    %89 = vector.load %arg1[%c4, %c0_77, %c0_78] : memref<6x32x128xf32, #tpu.memory_space<vmem>>, vector<1x32x128xf32>
    %90 = vector.shape_cast %89 : vector<1x32x128xf32> to vector<32x128xf32>
    %c4_79 = arith.constant 4 : index
    %c0_80 = arith.constant 0 : index
    %c0_81 = arith.constant 0 : index
    %91 = vector.load %arg2[%c4_79, %c0_80, %c0_81] : memref<6x32x128xf32, #tpu.memory_space<vmem>>, vector<1x32x128xf32>
    %92 = vector.shape_cast %91 : vector<1x32x128xf32> to vector<32x128xf32>
    %c4_82 = arith.constant 4 : index
    %c0_83 = arith.constant 0 : index
    %c0_84 = arith.constant 0 : index
    %93 = vector.load %arg3[%c4_82, %c0_83, %c0_84] : memref<6x32x128xf32, #tpu.memory_space<vmem>>, vector<1x32x128xf32>
    %94 = vector.shape_cast %93 : vector<1x32x128xf32> to vector<32x128xf32>
    %95 = arith.mulf %92, %94 : vector<32x128xf32>
    %96 = arith.addf %90, %95 : vector<32x128xf32>
    %c4_85 = arith.constant 4 : index
    %c0_86 = arith.constant 0 : index
    %c0_87 = arith.constant 0 : index
    %97 = vector.load %arg4[%c4_85, %c0_86, %c0_87] : memref<6x1x128xf32, #tpu.memory_space<vmem>>, vector<1x1x128xf32>
    %98 = vector.shape_cast %97 : vector<1x1x128xf32> to vector<1x128xf32>
    %c4_88 = arith.constant 4 : index
    %c0_89 = arith.constant 0 : index
    %c0_90 = arith.constant 0 : index
    %99 = vector.load %arg5[%c4_88, %c0_89, %c0_90] : memref<6x1x128xf32, #tpu.memory_space<vmem>>, vector<1x1x128xf32>
    %100 = vector.shape_cast %99 : vector<1x1x128xf32> to vector<1x128xf32>
    %c4_91 = arith.constant 4 : index
    %c0_92 = arith.constant 0 : index
    %c0_93 = arith.constant 0 : index
    %101 = vector.load %arg6[%c4_91, %c0_92, %c0_93] : memref<6x1x128xf32, #tpu.memory_space<vmem>>, vector<1x1x128xf32>
    %102 = vector.shape_cast %101 : vector<1x1x128xf32> to vector<1x128xf32>
    %103 = arith.mulf %100, %102 : vector<1x128xf32>
    %104 = arith.addf %98, %103 : vector<1x128xf32>
    %105 = vector.extract_strided_slice %88 {offsets = [0, 0], sizes = [8, 32], strides = [1, 1]} : vector<8x128xf32> to vector<8x32xf32>
    %cst_94 = arith.constant dense<0.000000e+00> : vector<8x128xf32>
    %106 = tpu.matmul %105, %96, %cst_94 {dimension_numbers = #tpu.dot_dimension_numbers<[1], [0], [0], [1], [0, 0, 1, 1], [], []>} : vector<8x32xf32>, vector<32x128xf32>, vector<8x128xf32> -> vector<8x128xf32>
    %107 = vector.broadcast %104 : vector<1x128xf32> to vector<8x128xf32>
    %108 = arith.addf %106, %107 : vector<8x128xf32>
    %cst_95 = arith.constant 0.000000e+00 : f32
    %109 = vector.broadcast %cst_95 : f32 to vector<8x128xf32>
    %110 = arith.maximumf %108, %109 : vector<8x128xf32>
    %c5 = arith.constant 5 : index
    %c0_96 = arith.constant 0 : index
    %c0_97 = arith.constant 0 : index
    %111 = vector.load %arg1[%c5, %c0_96, %c0_97] : memref<6x32x128xf32, #tpu.memory_space<vmem>>, vector<1x32x128xf32>
    %112 = vector.shape_cast %111 : vector<1x32x128xf32> to vector<32x128xf32>
    %c5_98 = arith.constant 5 : index
    %c0_99 = arith.constant 0 : index
    %c0_100 = arith.constant 0 : index
    %113 = vector.load %arg2[%c5_98, %c0_99, %c0_100] : memref<6x32x128xf32, #tpu.memory_space<vmem>>, vector<1x32x128xf32>
    %114 = vector.shape_cast %113 : vector<1x32x128xf32> to vector<32x128xf32>
    %c5_101 = arith.constant 5 : index
    %c0_102 = arith.constant 0 : index
    %c0_103 = arith.constant 0 : index
    %115 = vector.load %arg3[%c5_101, %c0_102, %c0_103] : memref<6x32x128xf32, #tpu.memory_space<vmem>>, vector<1x32x128xf32>
    %116 = vector.shape_cast %115 : vector<1x32x128xf32> to vector<32x128xf32>
    %117 = arith.mulf %114, %116 : vector<32x128xf32>
    %118 = arith.addf %112, %117 : vector<32x128xf32>
    %c5_104 = arith.constant 5 : index
    %c0_105 = arith.constant 0 : index
    %c0_106 = arith.constant 0 : index
    %119 = vector.load %arg4[%c5_104, %c0_105, %c0_106] : memref<6x1x128xf32, #tpu.memory_space<vmem>>, vector<1x1x128xf32>
    %120 = vector.shape_cast %119 : vector<1x1x128xf32> to vector<1x128xf32>
    %c5_107 = arith.constant 5 : index
    %c0_108 = arith.constant 0 : index
    %c0_109 = arith.constant 0 : index
    %121 = vector.load %arg5[%c5_107, %c0_108, %c0_109] : memref<6x1x128xf32, #tpu.memory_space<vmem>>, vector<1x1x128xf32>
    %122 = vector.shape_cast %121 : vector<1x1x128xf32> to vector<1x128xf32>
    %c5_110 = arith.constant 5 : index
    %c0_111 = arith.constant 0 : index
    %c0_112 = arith.constant 0 : index
    %123 = vector.load %arg6[%c5_110, %c0_111, %c0_112] : memref<6x1x128xf32, #tpu.memory_space<vmem>>, vector<1x1x128xf32>
    %124 = vector.shape_cast %123 : vector<1x1x128xf32> to vector<1x128xf32>
    %125 = arith.mulf %122, %124 : vector<1x128xf32>
    %126 = arith.addf %120, %125 : vector<1x128xf32>
    %127 = vector.extract_strided_slice %110 {offsets = [0, 0], sizes = [8, 32], strides = [1, 1]} : vector<8x128xf32> to vector<8x32xf32>
    %cst_113 = arith.constant dense<0.000000e+00> : vector<8x128xf32>
    %128 = tpu.matmul %127, %118, %cst_113 {dimension_numbers = #tpu.dot_dimension_numbers<[1], [0], [0], [1], [0, 0, 1, 1], [], []>} : vector<8x32xf32>, vector<32x128xf32>, vector<8x128xf32> -> vector<8x128xf32>
    %129 = vector.broadcast %126 : vector<1x128xf32> to vector<8x128xf32>
    %130 = arith.addf %128, %129 : vector<8x128xf32>
    %c0_114 = arith.constant 0 : index
    %c0_115 = arith.constant 0 : index
    %131 = vector.load %arg7[%c0_114, %c0_115] : memref<8x128xf32, #tpu.memory_space<vmem>>, vector<8x128xf32>
    tpu.vector_store %arg7[%c0_114, %c0_115], %130 {strides = array<i32>} : memref<8x128xf32, #tpu.memory_space<vmem>>, vector<8x128xf32>,
    return
  }
}

</mosaic_0001>

<llo_original>
// kernel: tpu_custom_call.1
$region0: #{tpu_custom_call.1}
  #allocation0 [shape = 'u32[]', space=smem, size = 0x4, offset = 0x4, fixed_abs, tag = 'smem constant byte address 0x4 - core index']
  #allocation1 [shape = 'u32[72,128]{1,0:T(1,128)}', space=vmem, size = 0x9000, scoped, tag = 'internal scratch']
  %s0 = inlined_call_operand.hbm [shape: f32[8,128], index: 0, kind: input, shape index: {}]
  %s1 = inlined_call_operand.hbm [shape: f32[6,32,128], index: 1, kind: input, shape index: {}]
  %s2 = inlined_call_operand.hbm [shape: f32[6,32,128], index: 2, kind: input, shape index: {}]
  %s3 = inlined_call_operand.hbm [shape: f32[6,32,128], index: 3, kind: input, shape index: {}]
  %s4 = inlined_call_operand.hbm [shape: f32[6,1,128], index: 4, kind: input, shape index: {}]
  %s5 = inlined_call_operand.hbm [shape: f32[6,1,128], index: 5, kind: input, shape index: {}]
  %s6 = inlined_call_operand.hbm [shape: f32[6,1,128], index: 6, kind: input, shape index: {}]
  %s7 = inlined_call_operand.hbm [shape: f32[8,128], index: 7, kind: output, shape index: {}]
  %s8 = sld [smem:[#allocation0]]
  $region66: #{tpu_custom_call.1} parent=0
    _
  %s10 = ssub.s32 1, %s8
  %s11 = scalar_select 0, %s10, %s8
  $region1: #{tpu_custom_call.1} parent=0
    #allocation2 [shape = 'u8[4096]{0}', space=vmem, size = 0x1000, scoped, tag = 'input window, operand 0, single buffered']
    #allocation3 [shape = 's32[1]{0}', space=sflag, size = 0x4, scoped, tag = 'scoped memory for tpu_custom_call.1']
    #allocation4 [shape = 's32[1]{0}', space=sflag, size = 0x4, scoped, tag = 'scoped memory for tpu_custom_call.1']
    #allocation5 [shape = 'u8[98304]{0}', space=vmem, size = 0x18000, scoped, tag = 'input window, operand 1, single buffered']
    #allocation6 [shape = 's32[1]{0}', space=sflag, size = 0x4, scoped, tag = 'scoped memory for tpu_custom_call.1']
    #allocation7 [shape = 'u8[98304]{0}', space=vmem, size = 0x18000, scoped, tag = 'input window, operand 2, single buffered']
    #allocation8 [shape = 'u8[98304]{0}', space=vmem, size = 0x18000, scoped, tag = 'input window, operand 3, single buffered']
    #allocation9 [shape = 's32[1]{0}', space=sflag, size = 0x4, scoped, tag = 'scoped memory for tpu_custom_call.1']
    #allocation10 [shape = 'u8[3072]{0}', space=vmem, size = 0xc00, scoped, tag = 'input window, operand 4, single buffered']
    #allocation11 [shape = 'u8[3072]{0}', space=vmem, size = 0xc00, scoped, tag = 'input window, operand 5, single buffered']
    #allocation12 [shape = 's32[1]{0}', space=sflag, size = 0x4, scoped, tag = 'scoped memory for tpu_custom_call.1']
    #allocation13 [shape = 'u8[3072]{0}', space=vmem, size = 0xc00, scoped, tag = 'input window, operand 6, single buffered']
    #allocation14 [shape = 'u8[4096]{0}', space=vmem, size = 0x1000, scoped, tag = 'output window, operand 0, single buffered']
    %12 = vsyncpa [#allocation3], 0
    %13 = vsyncpa [#allocation6], 0
    %14 = vsyncpa [#allocation9], 0
    %15 = vsyncpa [#allocation12], 0
    %16 = vsyncpa [#allocation4], 0
    // Predicated region
    $region2: #{tpu_custom_call.1} parent=1 // pred_check
      _
    $region3: #{tpu_custom_call.1} parent=1 // pred_check_branch
      %18 = sbr.rel (0) target = $region5
    $region4: #{tpu_custom_call.1} parent=1 // pred_region
      %20 = vsyncadd [#allocation3], 0
      %s22 = sshll.u32 %s0, 4
      %s23 = int_to_ptr.hbm [resolvable:$true] %s22
      %s24 = sshll.u32 [#allocation2], 4
      %s25 = int_to_ptr.vmem [resolvable:$true] %s24
      %27 = dma.hbm_to_vmem [thread:$0]  %s23, 128, %s25, [#allocation3]
    $region5: #{tpu_custom_call.1} parent=1 // pred_fallthru
      _
    // Predicated region
    $region6: #{tpu_custom_call.1} parent=1 // pred_check
      _
    $region7: #{tpu_custom_call.1} parent=1 // pred_check_branch
      %29 = sbr.rel (0) target = $region9
    $region8: #{tpu_custom_call.1} parent=1 // pred_region
      %31 = vsyncadd [#allocation6], 0
      %s32 = sshll.u32 %s1, 4
      %s33 = int_to_ptr.hbm [resolvable:$true] %s32
      %s34 = sshll.u32 [#allocation5], 4
      %s35 = int_to_ptr.vmem [resolvable:$true] %s34
      %40 = dma.hbm_to_vmem [thread:$0]  %s33, 3072, %s35, [#allocation6], 128, 128, 8
    $region9: #{tpu_custom_call.1} parent=1 // pred_fallthru
      _
    // Predicated region
    $region10: #{tpu_custom_call.1} parent=1 // pred_check
      _
    $region11: #{tpu_custom_call.1} parent=1 // pred_check_branch
      %42 = sbr.rel (0) target = $region13
    $region12: #{tpu_custom_call.1} parent=1 // pred_region
      %44 = vsyncadd [#allocation6], 0
      %s45 = sshll.u32 %s2, 4
      %s46 = int_to_ptr.hbm [resolvable:$true] %s45
      %s47 = sshll.u32 [#allocation7], 4
      %s48 = int_to_ptr.vmem [resolvable:$true] %s47
      %53 = dma.hbm_to_vmem [thread:$0]  %s46, 3072, %s48, [#allocation6], 128, 128, 8
    $region13: #{tpu_custom_call.1} parent=1 // pred_fallthru
      _
    // Predicated region
    $region14: #{tpu_custom_call.1} parent=1 // pred_check
      _
    $region15: #{tpu_custom_call.1} parent=1 // pred_check_branch
      %55 = sbr.rel (0) target = $region17
    $region16: #{tpu_custom_call.1} parent=1 // pred_region
      %57 = vsyncadd [#allocation9], 0
      %s58 = sshll.u32 %s3, 4
      %s59 = int_to_ptr.hbm [resolvable:$true] %s58
      %s60 = sshll.u32 [#allocation8], 4
      %s61 = int_to_ptr.vmem [resolvable:$true] %s60
      %66 = dma.hbm_to_vmem [thread:$0]  %s59, 3072, %s61, [#allocation9], 128, 128, 8
    $region17: #{tpu_custom_call.1} parent=1 // pred_fallthru
      _
    // Predicated region
    $region18: #{tpu_custom_call.1} parent=1 // pred_check
      _
    $region19: #{tpu_custom_call.1} parent=1 // pred_check_branch
      %68 = sbr.rel (0) target = $region21
    $region20: #{tpu_custom_call.1} parent=1 // pred_region
      %70 = vsyncadd [#allocation9], 0
      %s71 = sshll.u32 %s4, 4
      %s72 = int_to_ptr.hbm [resolvable:$true] %s71
      %s73 = sshll.u32 [#allocation10], 4
      %s74 = int_to_ptr.vmem [resolvable:$true] %s73
      %79 = dma.hbm_to_vmem [thread:$0]  %s72, 96, %s74, [#allocation9], 16, 16, 1
    $region21: #{tpu_custom_call.1} parent=1 // pred_fallthru
      _
    // Predicated region
    $region22: #{tpu_custom_call.1} parent=1 // pred_check
      _
    $region23: #{tpu_custom_call.1} parent=1 // pred_check_branch
      %81 = sbr.rel (0) target = $region25
    $region24: #{tpu_custom_call.1} parent=1 // pred_region
      %83 = vsyncadd [#allocation12], 0
      %s84 = sshll.u32 %s5, 4
      %s85 = int_to_ptr.hbm [resolvable:$true] %s84
      %s86 = sshll.u32 [#allocation11], 4
      %s87 = int_to_ptr.vmem [resolvable:$true] %s86
      %92 = dma.hbm_to_vmem [thread:$0]  %s85, 96, %s87, [#allocation12], 16, 16, 1
    $region25: #{tpu_custom_call.1} parent=1 // pred_fallthru
      _
    // Predicated region
    $region26: #{tpu_custom_call.1} parent=1 // pred_check
      _
    $region27: #{tpu_custom_call.1} parent=1 // pred_check_branch
      %94 = sbr.rel (0) target = $region29
    $region28: #{tpu_custom_call.1} parent=1 // pred_region
      %96 = vsyncadd [#allocation12], 0
      %s97 = sshll.u32 %s6, 4
      %s98 = int_to_ptr.hbm [resolvable:$true] %s97
      %s99 = sshll.u32 [#allocation13], 4
      %s100 = int_to_ptr.vmem [resolvable:$true] %s99
      %105 = dma.hbm_to_vmem [thread:$0]  %s98, 96, %s100, [#allocation12], 16, 16, 1
    $region29: #{tpu_custom_call.1} parent=1 // pred_fallthru
      _
    // Predicated region
    $region30: #{tpu_custom_call.1} parent=1 // pred_check
      _
    $region31: #{tpu_custom_call.1} parent=1 // pred_check_branch
      %107 = sbr.rel (0) target = $region33
    $region32: #{tpu_custom_call.1} parent=1 // pred_region
      %109 = dma.done [#allocation3], 128
    $region33: #{tpu_custom_call.1} parent=1 // pred_fallthru
      _
    // Predicated region
    $region34: #{tpu_custom_call.1} parent=1 // pred_check
      _
    $region35: #{tpu_custom_call.1} parent=1 // pred_check_branch
      %111 = sbr.rel (0) target = $region37
    $region36: #{tpu_custom_call.1} parent=1 // pred_region
      %113 = dma.done [#allocation6], 3072
    $region37: #{tpu_custom_call.1} parent=1 // pred_fallthru
      _
    // Predicated region
    $region38: #{tpu_custom_call.1} parent=1 // pred_check
      _
    $region39: #{tpu_custom_call.1} parent=1 // pred_check_branch
      %115 = sbr.rel (0) target = $region41
    $region40: #{tpu_custom_call.1} parent=1 // pred_region
      %117 = dma.done [#allocation6], 3072
    $region41: #{tpu_custom_call.1} parent=1 // pred_fallthru
      _
    // Predicated region
    $region42: #{tpu_custom_call.1} parent=1 // pred_check
      _
    $region43: #{tpu_custom_call.1} parent=1 // pred_check_branch
      %119 = sbr.rel (0) target = $region45
    $region44: #{tpu_custom_call.1} parent=1 // pred_region
      %121 = dma.done [#allocation9], 3072
    $region45: #{tpu_custom_call.1} parent=1 // pred_fallthru
      _
    // Predicated region
    $region46: #{tpu_custom_call.1} parent=1 // pred_check
      _
    $region47: #{tpu_custom_call.1} parent=1 // pred_check_branch
      %123 = sbr.rel (0) target = $region49
    $region48: #{tpu_custom_call.1} parent=1 // pred_region
      %125 = dma.done [#allocation9], 96
    $region49: #{tpu_custom_call.1} parent=1 // pred_fallthru
      _
    // Predicated region
    $region50: #{tpu_custom_call.1} parent=1 // pred_check
      _
    $region51: #{tpu_custom_call.1} parent=1 // pred_check_branch
      %127 = sbr.rel (0) target = $region53
    $region52: #{tpu_custom_call.1} parent=1 // pred_region
      %129 = dma.done [#allocation12], 96
    $region53: #{tpu_custom_call.1} parent=1 // pred_fallthru
      _
    // Predicated region
    $region54: #{tpu_custom_call.1} parent=1 // pred_check
      _
    $region55: #{tpu_custom_call.1} parent=1 // pred_check_branch
      %131 = sbr.rel (0) target = $region57
    $region56: #{tpu_custom_call.1} parent=1 // pred_region
      %133 = dma.done [#allocation12], 96
    $region57: #{tpu_custom_call.1} parent=1 // pred_fallthru
      _
    %v134 = vld [vmem:[#allocation2] sm:$0xff]
    %v135 = vld [vmem:[#allocation5] sm:$0xff]
    %v136 = vld [vmem:[#allocation5 + $0x8] sm:$0xff]
    %v137 = vld [vmem:[#allocation5 + $0x10] sm:$0xff]
    %v138 = vld [vmem:[#allocation5 + $0x18] sm:$0xff]
    %v139 = vld [vmem:[#allocation7] sm:$0xff]
    %v140 = vld [vmem:[#allocation7 + $0x8] sm:$0xff]
    %v141 = vld [vmem:[#allocation7 + $0x10] sm:$0xff]
    %v142 = vld [vmem:[#allocation7 + $0x18] sm:$0xff]
    %v143 = vld [vmem:[#allocation8] sm:$0xff]
    %v144 = vld [vmem:[#allocation8 + $0x8] sm:$0xff]
    %v145 = vld [vmem:[#allocation8 + $0x10] sm:$0xff]
    %v146 = vld [vmem:[#allocation8 + $0x18] sm:$0xff]
    %v147 = vmul.f32 %v139, %v143
    %v148 = vmul.f32 %v140, %v144
    %v149 = vmul.f32 %v141, %v145
    %v150 = vmul.f32 %v142, %v146
    %v151 = vadd.f32 %v135, %v147
    %v152 = vadd.f32 %v136, %v148
    %v153 = vadd.f32 %v137, %v149
    %v154 = vadd.f32 %v138, %v150
    %v155 = vld [vmem:[#allocation10] sm:$0x1]
    %v156 = vld [vmem:[#allocation11] sm:$0x1]
    %v157 = vld [vmem:[#allocation13] sm:$0x1]
    %v158 = vmul.f32 %v156, %v157
    %v159 = vadd.f32 %v155, %v158
    %v161 = vperm.slane %v159, 0
    %vm163 = vcmask 261120
    %v165 = vsel %vm163, %v134, 0
    %167 = vmatpush.msra.mxu0 0.0
    %168 = vmatpush.msra.mxu0 0.0
    %169 = vmatpush.msra.mxu0 0.0
    %170 = vmatpush.msra.mxu0 0.0
    %171 = vmatpush.msra.mxu0 0.0
    %172 = vmatpush.msra.mxu0 0.0
    %173 = vmatpush.msra.mxu0 0.0
    %174 = vmatpush.msra.mxu0 0.0
    %175 = vmatpush.msra.mxu0 0.0
    %176 = vmatpush.msra.mxu0 0.0
    %177 = vmatpush.msra.mxu0 0.0
    %178 = vmatpush.msra.mxu0 0.0
    %179 = vmatpush.msra.mxu0 %v154
    %180 = vmatpush.msra.mxu0 %v153
    %181 = vmatpush.msra.mxu0 %v152
    %182 = vmatpush.msra.mxu0 %v151
    %183 = vmatmul.f32.gmra.mxu0 %v165
    %v184 = vpop.f32.mrf.mxu0
    %v185 = vadd.f32 %v161, %v184
    %186 = vdwg.mxu0
    %v187 = vmax.f32 %v185, 0.0
    %s188 = scalar_lea.vmem [#allocation5], 32
    %v189 = vld [vmem:[%s188] sm:$0xff]
    %v190 = vld [vmem:[%s188 + $0x8] sm:$0xff]
    %v191 = vld [vmem:[%s188 + $0x10] sm:$0xff]
    %v192 = vld [vmem:[%s188 + $0x18] sm:$0xff]
    %s193 = scalar_lea.vmem [#allocation7], 32
    %v194 = vld [vmem:[%s193] sm:$0xff]
    %v195 = vld [vmem:[%s193 + $0x8] sm:$0xff]
    %v196 = vld [vmem:[%s193 + $0x10] sm:$0xff]
    %v197 = vld [vmem:[%s193 + $0x18] sm:$0xff]
    %s198 = scalar_lea.vmem [#allocation8], 32
    %v199 = vld [vmem:[%s198] sm:$0xff]
    %v200 = vld [vmem:[%s198 + $0x8] sm:$0xff]
    %v201 = vld [vmem:[%s198 + $0x10] sm:$0xff]
    %v202 = vld [vmem:[%s198 + $0x18] sm:$0xff]
    %v203 = vmul.f32 %v194, %v199
    %v204 = vmul.f32 %v195, %v200
    %v205 = vmul.f32 %v196, %v201
    %v206 = vmul.f32 %v197, %v202
    %v207 = vadd.f32 %v189, %v203
    %v208 = vadd.f32 %v190, %v204
    %v209 = vadd.f32 %v191, %v205
    %v210 = vadd.f32 %v192, %v206
    %s211 = scalar_lea.vmem [#allocation10], 1
    %v212 = vld [vmem:[%s211] sm:$0x1]
    %s213 = scalar_lea.vmem [#allocation11], 1
    %v214 = vld [vmem:[%s213] sm:$0x1]
    %s215 = scalar_lea.vmem [#allocation13], 1
    %v216 = vld [vmem:[%s215] sm:$0x1]
    %v217 = vmul.f32 %v214, %v216
    %v218 = vadd.f32 %v212, %v217
    %v220 = vperm.slane %v218, 0
    %v223 = vsel %vm163, %v187, 0
    %225 = vmatpush.msra.mxu0 0.0
    %226 = vmatpush.msra.mxu0 0.0
    %227 = vmatpush.msra.mxu0 0.0
    %228 = vmatpush.msra.mxu0 0.0
    %229 = vmatpush.msra.mxu0 0.0
    %230 = vmatpush.msra.mxu0 0.0
    %231 = vmatpush.msra.mxu0 0.0
    %232 = vmatpush.msra.mxu0 0.0
    %233 = vmatpush.msra.mxu0 0.0
    %234 = vmatpush.msra.mxu0 0.0
    %235 = vmatpush.msra.mxu0 0.0
    %236 = vmatpush.msra.mxu0 0.0
    %237 = vmatpush.msra.mxu0 %v210
    %238 = vmatpush.msra.mxu0 %v209
    %239 = vmatpush.msra.mxu0 %v208
    %240 = vmatpush.msra.mxu0 %v207
    %241 = vmatmul.f32.gmra.mxu0 %v223
    %v242 = vpop.f32.mrf.mxu0
    %v243 = vadd.f32 %v220, %v242
    %244 = vdwg.mxu0
    %v245 = vmax.f32 %v243, 0.0
    %s246 = scalar_lea.vmem [#allocation5], 64
    %v247 = vld [vmem:[%s246] sm:$0xff]
    %v248 = vld [vmem:[%s246 + $0x8] sm:$0xff]
    %v249 = vld [vmem:[%s246 + $0x10] sm:$0xff]
    %v250 = vld [vmem:[%s246 + $0x18] sm:$0xff]
    %s251 = scalar_lea.vmem [#allocation7], 64
    %v252 = vld [vmem:[%s251] sm:$0xff]
    %v253 = vld [vmem:[%s251 + $0x8] sm:$0xff]
    %v254 = vld [vmem:[%s251 + $0x10] sm:$0xff]
    %v255 = vld [vmem:[%s251 + $0x18] sm:$0xff]
    %s256 = scalar_lea.vmem [#allocation8], 64
    %v257 = vld [vmem:[%s256] sm:$0xff]
    %v258 = vld [vmem:[%s256 + $0x8] sm:$0xff]
    %v259 = vld [vmem:[%s256 + $0x10] sm:$0xff]
    %v260 = vld [vmem:[%s256 + $0x18] sm:$0xff]
    %v261 = vmul.f32 %v252, %v257
    %v262 = vmul.f32 %v253, %v258
    %v263 = vmul.f32 %v254, %v259
    %v264 = vmul.f32 %v255, %v260
    %v265 = vadd.f32 %v247, %v261
    %v266 = vadd.f32 %v248, %v262
    %v267 = vadd.f32 %v249, %v263
    %v268 = vadd.f32 %v250, %v264
    %s269 = scalar_lea.vmem [#allocation10], 2
    %v270 = vld [vmem:[%s269] sm:$0x1]
    %s271 = scalar_lea.vmem [#allocation11], 2
    %v272 = vld [vmem:[%s271] sm:$0x1]
    %s273 = scalar_lea.vmem [#allocation13], 2
    %v274 = vld [vmem:[%s273] sm:$0x1]
    %v275 = vmul.f32 %v272, %v274
    %v276 = vadd.f32 %v270, %v275
    %v278 = vperm.slane %v276, 0
    %v281 = vsel %vm163, %v245, 0
    %283 = vmatpush.msra.mxu0 0.0
    %284 = vmatpush.msra.mxu0 0.0
    %285 = vmatpush.msra.mxu0 0.0
    %286 = vmatpush.msra.mxu0 0.0
    %287 = vmatpush.msra.mxu0 0.0
    %288 = vmatpush.msra.mxu0 0.0
    %289 = vmatpush.msra.mxu0 0.0
    %290 = vmatpush.msra.mxu0 0.0
    %291 = vmatpush.msra.mxu0 0.0
    %292 = vmatpush.msra.mxu0 0.0
    %293 = vmatpush.msra.mxu0 0.0
    %294 = vmatpush.msra.mxu0 0.0
    %295 = vmatpush.msra.mxu0 %v268
    %296 = vmatpush.msra.mxu0 %v267
    %297 = vmatpush.msra.mxu0 %v266
    %298 = vmatpush.msra.mxu0 %v265
    %299 = vmatmul.f32.gmra.mxu0 %v281
    %v300 = vpop.f32.mrf.mxu0
    %v301 = vadd.f32 %v278, %v300
    %302 = vdwg.mxu0
    %v303 = vmax.f32 %v301, 0.0
    %s304 = scalar_lea.vmem [#allocation5], 96
    %v305 = vld [vmem:[%s304] sm:$0xff]
    %v306 = vld [vmem:[%s304 + $0x8] sm:$0xff]
    %v307 = vld [vmem:[%s304 + $0x10] sm:$0xff]
    %v308 = vld [vmem:[%s304 + $0x18] sm:$0xff]
    %s309 = scalar_lea.vmem [#allocation7], 96
    %v310 = vld [vmem:[%s309] sm:$0xff]
    %v311 = vld [vmem:[%s309 + $0x8] sm:$0xff]
    %v312 = vld [vmem:[%s309 + $0x10] sm:$0xff]
    %v313 = vld [vmem:[%s309 + $0x18] sm:$0xff]
    %s314 = scalar_lea.vmem [#allocation8], 96
    %v315 = vld [vmem:[%s314] sm:$0xff]
    %v316 = vld [vmem:[%s314 + $0x8] sm:$0xff]
    %v317 = vld [vmem:[%s314 + $0x10] sm:$0xff]
    %v318 = vld [vmem:[%s314 + $0x18] sm:$0xff]
    %v319 = vmul.f32 %v310, %v315
    %v320 = vmul.f32 %v311, %v316
    %v321 = vmul.f32 %v312, %v317
    %v322 = vmul.f32 %v313, %v318
    %v323 = vadd.f32 %v305, %v319
    %v324 = vadd.f32 %v306, %v320
    %v325 = vadd.f32 %v307, %v321
    %v326 = vadd.f32 %v308, %v322
    %s327 = scalar_lea.vmem [#allocation10], 3
    %v328 = vld [vmem:[%s327] sm:$0x1]
    %s329 = scalar_lea.vmem [#allocation11], 3
    %v330 = vld [vmem:[%s329] sm:$0x1]
    %s331 = scalar_lea.vmem [#allocation13], 3
    %v332 = vld [vmem:[%s331] sm:$0x1]
    %v333 = vmul.f32 %v330, %v332
    %v334 = vadd.f32 %v328, %v333
    %v336 = vperm.slane %v334, 0
    %v339 = vsel %vm163, %v303, 0
    %341 = vmatpush.msra.mxu0 0.0
    %342 = vmatpush.msra.mxu0 0.0
    %343 = vmatpush.msra.mxu0 0.0
    %344 = vmatpush.msra.mxu0 0.0
    %345 = vmatpush.msra.mxu0 0.0
    %346 = vmatpush.msra.mxu0 0.0
    %347 = vmatpush.msra.mxu0 0.0
    %348 = vmatpush.msra.mxu0 0.0
    %349 = vmatpush.msra.mxu0 0.0
    %350 = vmatpush.msra.mxu0 0.0
    %351 = vmatpush.msra.mxu0 0.0
    %352 = vmatpush.msra.mxu0 0.0
    %353 = vmatpush.msra.mxu0 %v326
    %354 = vmatpush.msra.mxu0 %v325
    %355 = vmatpush.msra.mxu0 %v324
    %356 = vmatpush.msra.mxu0 %v323
    %357 = vmatmul.f32.gmra.mxu0 %v339
    %v358 = vpop.f32.mrf.mxu0
    %v359 = vadd.f32 %v336, %v358
    %360 = vdwg.mxu0
    %v361 = vmax.f32 %v359, 0.0
    %s362 = scalar_lea.vmem [#allocation5], 128
    %v363 = vld [vmem:[%s362] sm:$0xff]
    %v364 = vld [vmem:[%s362 + $0x8] sm:$0xff]
    %v365 = vld [vmem:[%s362 + $0x10] sm:$0xff]
    %v366 = vld [vmem:[%s362 + $0x18] sm:$0xff]
    %s367 = scalar_lea.vmem [#allocation7], 128
    %v368 = vld [vmem:[%s367] sm:$0xff]
    %v369 = vld [vmem:[%s367 + $0x8] sm:$0xff]
    %v370 = vld [vmem:[%s367 + $0x10] sm:$0xff]
    %v371 = vld [vmem:[%s367 + $0x18] sm:$0xff]
    %s372 = scalar_lea.vmem [#allocation8], 128
    %v373 = vld [vmem:[%s372] sm:$0xff]
    %v374 = vld [vmem:[%s372 + $0x8] sm:$0xff]
    %v375 = vld [vmem:[%s372 + $0x10] sm:$0xff]
    %v376 = vld [vmem:[%s372 + $0x18] sm:$0xff]
    %v377 = vmul.f32 %v368, %v373
    %v378 = vmul.f32 %v369, %v374
    %v379 = vmul.f32 %v370, %v375
    %v380 = vmul.f32 %v371, %v376
    %v381 = vadd.f32 %v363, %v377
    %v382 = vadd.f32 %v364, %v378
    %v383 = vadd.f32 %v365, %v379
    %v384 = vadd.f32 %v366, %v380
    %s385 = scalar_lea.vmem [#allocation10], 4
    %v386 = vld [vmem:[%s385] sm:$0x1]
    %s387 = scalar_lea.vmem [#allocation11], 4
    %v388 = vld [vmem:[%s387] sm:$0x1]
    %s389 = scalar_lea.vmem [#allocation13], 4
    %v390 = vld [vmem:[%s389] sm:$0x1]
    %v391 = vmul.f32 %v388, %v390
    %v392 = vadd.f32 %v386, %v391
    %v394 = vperm.slane %v392, 0
    %v397 = vsel %vm163, %v361, 0
    %399 = vmatpush.msra.mxu0 0.0
    %400 = vmatpush.msra.mxu0 0.0
    %401 = vmatpush.msra.mxu0 0.0
    %402 = vmatpush.msra.mxu0 0.0
    %403 = vmatpush.msra.mxu0 0.0
    %404 = vmatpush.msra.mxu0 0.0
    %405 = vmatpush.msra.mxu0 0.0
    %406 = vmatpush.msra.mxu0 0.0
    %407 = vmatpush.msra.mxu0 0.0
    %408 = vmatpush.msra.mxu0 0.0
    %409 = vmatpush.msra.mxu0 0.0
    %410 = vmatpush.msra.mxu0 0.0
    %411 = vmatpush.msra.mxu0 %v384
    %412 = vmatpush.msra.mxu0 %v383
    %413 = vmatpush.msra.mxu0 %v382
    %414 = vmatpush.msra.mxu0 %v381
    %415 = vmatmul.f32.gmra.mxu0 %v397
    %v416 = vpop.f32.mrf.mxu0
    %v417 = vadd.f32 %v394, %v416
    %418 = vdwg.mxu0
    %v419 = vmax.f32 %v417, 0.0
    %s420 = scalar_lea.vmem [#allocation5], 160
    %v421 = vld [vmem:[%s420] sm:$0xff]
    %v422 = vld [vmem:[%s420 + $0x8] sm:$0xff]
    %v423 = vld [vmem:[%s420 + $0x10] sm:$0xff]
    %v424 = vld [vmem:[%s420 + $0x18] sm:$0xff]
    %s425 = scalar_lea.vmem [#allocation7], 160
    %v426 = vld [vmem:[%s425] sm:$0xff]
    %v427 = vld [vmem:[%s425 + $0x8] sm:$0xff]
    %v428 = vld [vmem:[%s425 + $0x10] sm:$0xff]
    %v429 = vld [vmem:[%s425 + $0x18] sm:$0xff]
    %s430 = scalar_lea.vmem [#allocation8], 160
    %v431 = vld [vmem:[%s430] sm:$0xff]
    %v432 = vld [vmem:[%s430 + $0x8] sm:$0xff]
    %v433 = vld [vmem:[%s430 + $0x10] sm:$0xff]
    %v434 = vld [vmem:[%s430 + $0x18] sm:$0xff]
    %v435 = vmul.f32 %v426, %v431
    %v436 = vmul.f32 %v427, %v432
    %v437 = vmul.f32 %v428, %v433
    %v438 = vmul.f32 %v429, %v434
    %v439 = vadd.f32 %v421, %v435
    %v440 = vadd.f32 %v422, %v436
    %v441 = vadd.f32 %v423, %v437
    %v442 = vadd.f32 %v424, %v438
    %s443 = scalar_lea.vmem [#allocation10], 5
    %v444 = vld [vmem:[%s443] sm:$0x1]
    %s445 = scalar_lea.vmem [#allocation11], 5
    %v446 = vld [vmem:[%s445] sm:$0x1]
    %s447 = scalar_lea.vmem [#allocation13], 5
    %v448 = vld [vmem:[%s447] sm:$0x1]
    %v449 = vmul.f32 %v446, %v448
    %v450 = vadd.f32 %v444, %v449
    %v452 = vperm.slane %v450, 0
    %v455 = vsel %vm163, %v419, 0
    %457 = vmatpush.msra.mxu0 0.0
    %458 = vmatpush.msra.mxu0 0.0
    %459 = vmatpush.msra.mxu0 0.0
    %460 = vmatpush.msra.mxu0 0.0
    %461 = vmatpush.msra.mxu0 0.0
    %462 = vmatpush.msra.mxu0 0.0
    %463 = vmatpush.msra.mxu0 0.0
    %464 = vmatpush.msra.mxu0 0.0
    %465 = vmatpush.msra.mxu0 0.0
    %466 = vmatpush.msra.mxu0 0.0
    %467 = vmatpush.msra.mxu0 0.0
    %468 = vmatpush.msra.mxu0 0.0
    %469 = vmatpush.msra.mxu0 %v442
    %470 = vmatpush.msra.mxu0 %v441
    %471 = vmatpush.msra.mxu0 %v440
    %472 = vmatpush.msra.mxu0 %v439
    %473 = vmatmul.f32.gmra.mxu0 %v455
    %v474 = vpop.f32.mrf.mxu0
    %v475 = vadd.f32 %v452, %v474
    %476 = vdwg.mxu0
    %477 = vst [vmem:[#allocation14] sm:$0xff] %v475
    // Predicated region
    $region58: #{tpu_custom_call.1} parent=1 // pred_check
      _
    $region59: #{tpu_custom_call.1} parent=1 // pred_check_branch
      %479 = sbr.rel (0) target = $region61
    $region60: #{tpu_custom_call.1} parent=1 // pred_region
      %481 = vsyncadd [#allocation4], 0
      %s483 = sshll.u32 [#allocation14], 4
      %s484 = int_to_ptr.vmem [resolvable:$true] %s483
      %s485 = sshll.u32 %s7, 4
      %s486 = int_to_ptr.hbm [resolvable:$true] %s485
      %488 = dma.vmem_to_hbm [thread:$0]  %s484, 128, %s486, [#allocation4]
    $region61: #{tpu_custom_call.1} parent=1 // pred_fallthru
      _
    // Predicated region
    $region62: #{tpu_custom_call.1} parent=1 // pred_check
      _
    $region63: #{tpu_custom_call.1} parent=1 // pred_check_branch
      %490 = sbr.rel (0) target = $region65
    $region64: #{tpu_custom_call.1} parent=1 // pred_region
      %492 = dma.done [#allocation4], 128
    $region65: #{tpu_custom_call.1} parent=1 // pred_fallthru
      _
    %493 = vsyncpa [#allocation3], 1
    %494 = vsyncpa [#allocation6], 1
    %495 = vsyncpa [#allocation9], 1
    %496 = vsyncpa [#allocation12], 1
    %497 = vsyncpa [#allocation4], 1

</llo_original>
